<compile_context>
chip_gen: v5e
topology: v5e:2x2
jax: 0.10.0
libtpu: 0.0.40
codegen_flags: <defaults>
</compile_context>

<pallas_src>
import numpy as np
import jax
import jax.numpy as jnp
from jax.experimental import pallas as pl
from jax.experimental.pallas import tpu as pltpu


# ----------------------------- kernel weights -------------------------------
def _gaussian_kernel_1d(ksize: int, sigma: float) -> np.ndarray:
    """Reproduce cv2.getGaussianKernel(ksize, sigma) (float64, sums to 1)."""
    if sigma <= 0:
        sigma = 0.3 * ((ksize - 1) * 0.5 - 1) + 0.8
    x = np.arange(ksize, dtype=np.float64) - (ksize - 1) / 2.0
    k1 = np.exp(-(x * x) / (2.0 * sigma * sigma))
    return k1 / k1.sum()


def _reflect_index(r: int, n: int) -> int:
    """'reflect' (no edge repeat) index mapping, multi-bounce safe."""
    while r < 0 or r >= n:
        if r < 0:
            r = -r
        if r >= n:
            r = 2 * (n - 1) - r
    return r


def _reflect_band_matrices(k1: np.ndarray, h: int, w: int):
    """Banded matrices folding the separable Gaussian AND the reflect padding.

    For a single (h, w) plane:  filter2D_reflect(x, outer(k1, k1)) == Vr @ x @ Hr.
    """
    k = k1.shape[0]
    p = k // 2
    Vr = np.zeros((h, h), np.float64)
    for i in range(h):
        for dy in range(k):
            Vr[i, _reflect_index(i + dy - p, h)] += k1[dy]
    Hr = np.zeros((w, w), np.float64)
    for j in range(w):
        for dx in range(k):
            Hr[_reflect_index(j + dx - p, w), j] += k1[dx]
    return Vr.astype(np.float32), Hr.astype(np.float32)


# ------------------------------- Pallas kernel ------------------------------
def _make_usm_kernel(weight: float, threshold: float):
    hi = jax.lax.Precision.HIGHEST

    def _filt(x, V, H):
        # Vertical then horizontal 1D Gaussian pass, both on the MXU; reflect
        # padding is already baked into the band structure of V / H.
        t = jnp.dot(V, x, preferred_element_type=jnp.float32, precision=hi)
        return jnp.dot(t, H, preferred_element_type=jnp.float32, precision=hi)

    def kernel(img_ref, v_ref, h_ref, out_ref):
        img = img_ref[...]          # (h, w)
        V = v_ref[...]              # (h, h)
        H = h_ref[...]              # (w, w)

        blur = _filt(img, V, H)
        residual = img - blur
        mask = (jnp.abs(residual) * 255.0 > threshold).astype(jnp.float32)
        soft = _filt(mask, V, H)

        sharp = jnp.clip(img + weight * residual, 0.0, 1.0)
        out_ref[...] = soft * sharp + (1.0 - soft) * img

    return kernel


# --------------------------------- wrapper ----------------------------------
class USMSharpPallas:
    def __init__(self, radius: int = 50, sigma: float = 0):
        if radius % 2 == 0:
            radius += 1
        self.radius = radius
        self.k1 = _gaussian_kernel_1d(radius, sigma)                    # float64
        # Full 2D kernel kept only for the reference check (torch buffer equiv).
        self.kernel = np.outer(self.k1, self.k1).astype(np.float32)     # (k, k)
        self._band_cache = {}

    def _bands(self, h: int, w: int):
        key = (h, w)
        if key not in self._band_cache:
            self._band_cache[key] = _reflect_band_matrices(self.k1, h, w)
        return self._band_cache[key]

    def __call__(self, img, weight: float = 0.5, threshold: float = 10):
        b, c, h, w = img.shape
        img = img.astype(jnp.float32)
        Vr_np, Hr_np = self._bands(h, w)
        Vr = jnp.asarray(Vr_np)
        Hr = jnp.asarray(Hr_np)

        plane_spec = pl.BlockSpec((None, None, h, w), lambda i, j: (i, j, 0, 0))
        v_spec = pl.BlockSpec((h, h), lambda i, j: (0, 0))   # constant block:
        h_spec = pl.BlockSpec((w, w), lambda i, j: (0, 0))   # fetched once, kept resident

        plane_bytes = h * w * 4
        band_bytes = (h * h + w * w) * 4
        # double-buffered plane in/out + bands + compiler temps, with headroom,
        # capped below the v7x safe scoped-VMEM ceiling.
        vmem_limit = int(min(48 * 2**20,
                             max(4 * 2**20, 16 * plane_bytes + 4 * band_bytes + 2 * 2**20)))

        out = pl.pallas_call(
            _make_usm_kernel(float(weight), float(threshold)),
            out_shape=jax.ShapeDtypeStruct((b, c, h, w), jnp.float32),
            grid=(b, c),
            in_specs=[plane_spec, v_spec, h_spec],
            out_specs=plane_spec,
            compiler_params=pltpu.CompilerParams(
                dimension_semantics=("parallel", "parallel"),
                vmem_limit_bytes=vmem_limit,
            ),
        )(img, Vr, Hr)
        return out


# ---------------- pure-JAX reference (for verification only) ----------------
def _filter2d_ref(img, kern2d):
    b, c, h, w = img.shape
    k = kern2d.shape[0]
    p = k // 2
    x = jnp.pad(img, ((0, 0), (0, 0), (p, p), (p, p)), mode="reflect")
    out = jnp.zeros_like(img)
    for dy in range(k):
        for dx in range(k):
            out = out + float(kern2d[dy, dx]) * x[:, :, dy:dy + h, dx:dx + w]
    return out


def _usm_ref(img, kern2d, weight=0.5, threshold=10):
    blur = _filter2d_ref(img, kern2d)
    residual = img - blur
    mask = (jnp.abs(residual) * 255.0 > threshold).astype(jnp.float32)
    soft_mask = _filter2d_ref(mask, kern2d)
    sharp = jnp.clip(img + weight * residual, 0.0, 1.0)
    return soft_mask * sharp + (1.0 - soft_mask) * img


if __name__ == "__main__":
    key = jax.random.PRNGKey(0)
    b, c, h, w = 2, 4, 16, 16
    img = jax.random.uniform(key, (b, c, h, w), dtype=jnp.float32)  # images in [0, 1]

    # radius=8 is even -> module bumps it to 9 (small test size; module default 50 -> 51).
    usm = USMSharpPallas(radius=8, sigma=0)

    out = jax.block_until_ready(usm(img))
    assert out.shape == (b, c, h, w) and out.dtype == jnp.float32

    ref = jax.block_until_ready(_usm_ref(img, usm.kernel))
    np.testing.assert_allclose(np.asarray(out), np.asarray(ref), atol=1e-5, rtol=1e-5)

    print("KERNEL_OK")
</pallas_src>

<mosaic_0001>
module attributes {stable_mosaic.version = 11 : i64} {
  func.func @kernel(%arg0: i32, %arg1: i32, %arg2: memref<1x1x16x16xf32, #tpu.memory_space<vmem>>, %arg3: memref<16x16xf32, #tpu.memory_space<vmem>>, %arg4: memref<16x16xf32, #tpu.memory_space<vmem>>, %arg5: memref<1x1x16x16xf32, #tpu.memory_space<vmem>>) attributes {dimension_semantics = [#tpu.dimension_semantics<parallel>, #tpu.dimension_semantics<parallel>], iteration_bounds = array<i64: 2, 4>, scalar_prefetch = 0 : i64, scratch_operands = 0 : i64, tpu.core_type = #tpu.core_type<tc>, window_params = [{transform_indices = @transform_0, window_bounds = array<i64: 1, 1, 16, 16>}, {pipeline_mode = #tpu.pipeline_mode<synchronous>, transform_indices = @transform_1, window_bounds = array<i64: 16, 16>}, {pipeline_mode = #tpu.pipeline_mode<synchronous>, transform_indices = @transform_2, window_bounds = array<i64: 16, 16>}, {transform_indices = @transform_3, window_bounds = array<i64: 1, 1, 16, 16>}]} {
    %c0 = arith.constant 0 : index
    %c0_0 = arith.constant 0 : index
    %c0_1 = arith.constant 0 : index
    %c0_2 = arith.constant 0 : index
    %0 = vector.load %arg2[%c0, %c0_0, %c0_1, %c0_2] : memref<1x1x16x16xf32, #tpu.memory_space<vmem>>, vector<1x1x16x16xf32>
    %1 = vector.shape_cast %0 : vector<1x1x16x16xf32> to vector<16x16xf32>
    %c0_3 = arith.constant 0 : index
    %c0_4 = arith.constant 0 : index
    %2 = vector.load %arg3[%c0_3, %c0_4] : memref<16x16xf32, #tpu.memory_space<vmem>>, vector<16x16xf32>
    %c0_5 = arith.constant 0 : index
    %c0_6 = arith.constant 0 : index
    %3 = vector.load %arg4[%c0_5, %c0_6] : memref<16x16xf32, #tpu.memory_space<vmem>>, vector<16x16xf32>
    %cst = arith.constant dense<0.000000e+00> : vector<16x16xf32>
    %4 = tpu.matmul %2, %1, %cst {dimension_numbers = #tpu.dot_dimension_numbers<[1], [0], [0], [1], [0, 0, 1, 1], [], []>, precision = #tpu.contract_precision<fp32>} : vector<16x16xf32>, vector<16x16xf32>, vector<16x16xf32> -> vector<16x16xf32>
    %cst_7 = arith.constant dense<0.000000e+00> : vector<16x16xf32>
    %5 = tpu.matmul %4, %3, %cst_7 {dimension_numbers = #tpu.dot_dimension_numbers<[1], [0], [0], [1], [0, 0, 1, 1], [], []>, precision = #tpu.contract_precision<fp32>} : vector<16x16xf32>, vector<16x16xf32>, vector<16x16xf32> -> vector<16x16xf32>
    %6 = arith.subf %1, %5 : vector<16x16xf32>
    %7 = math.absf %6 : vector<16x16xf32>
    %cst_8 = arith.constant 2.550000e+02 : f32
    %8 = vector.broadcast %cst_8 : f32 to vector<16x16xf32>
    %9 = arith.mulf %7, %8 : vector<16x16xf32>
    %cst_9 = arith.constant 1.000000e+01 : f32
    %10 = vector.broadcast %cst_9 : f32 to vector<16x16xf32>
    %11 = arith.cmpf ogt, %9, %10 : vector<16x16xf32>
    %12 = arith.extui %11 : vector<16x16xi1> to vector<16x16xi32>
    %13 = arith.sitofp %12 : vector<16x16xi32> to vector<16x16xf32>
    %cst_10 = arith.constant dense<0.000000e+00> : vector<16x16xf32>
    %14 = tpu.matmul %2, %13, %cst_10 {dimension_numbers = #tpu.dot_dimension_numbers<[1], [0], [0], [1], [0, 0, 1, 1], [], []>, precision = #tpu.contract_precision<fp32>} : vector<16x16xf32>, vector<16x16xf32>, vector<16x16xf32> -> vector<16x16xf32>
    %cst_11 = arith.constant dense<0.000000e+00> : vector<16x16xf32>
    %15 = tpu.matmul %14, %3, %cst_11 {dimension_numbers = #tpu.dot_dimension_numbers<[1], [0], [0], [1], [0, 0, 1, 1], [], []>, precision = #tpu.contract_precision<fp32>} : vector<16x16xf32>, vector<16x16xf32>, vector<16x16xf32> -> vector<16x16xf32>
    %cst_12 = arith.constant 5.000000e-01 : f32
    %16 = vector.broadcast %cst_12 : f32 to vector<16x16xf32>
    %17 = arith.mulf %16, %6 : vector<16x16xf32>
    %18 = arith.addf %1, %17 : vector<16x16xf32>
    %cst_13 = arith.constant 0.000000e+00 : f32
    %cst_14 = arith.constant 1.000000e+00 : f32
    %19 = vector.broadcast %cst_13 : f32 to vector<16x16xf32>
    %20 = arith.maximumf %19, %18 : vector<16x16xf32>
    %21 = vector.broadcast %cst_14 : f32 to vector<16x16xf32>
    %22 = arith.minimumf %21, %20 : vector<16x16xf32>
    %23 = arith.mulf %15, %22 : vector<16x16xf32>
    %cst_15 = arith.constant 1.000000e+00 : f32
    %24 = vector.broadcast %cst_15 : f32 to vector<16x16xf32>
    %25 = arith.subf %24, %15 : vector<16x16xf32>
    %26 = arith.mulf %25, %1 : vector<16x16xf32>
    %27 = arith.addf %23, %26 : vector<16x16xf32>
    %c0_16 = arith.constant 0 : index
    %c0_17 = arith.constant 0 : index
    %c0_18 = arith.constant 0 : index
    %c0_19 = arith.constant 0 : index
    %28 = vector.load %arg5[%c0_16, %c0_17, %c0_18, %c0_19] : memref<1x1x16x16xf32, #tpu.memory_space<vmem>>, vector<1x1x16x16xf32>
    %29 = vector.shape_cast %28 : vector<1x1x16x16xf32> to vector<16x16xf32>
    %30 = vector.shape_cast %27 : vector<16x16xf32> to vector<1x1x16x16xf32>
    tpu.vector_store %arg5[%c0_16, %c0_17, %c0_18, %c0_19], %30 {strides = array<i32>} : memref<1x1x16x16xf32, #tpu.memory_space<vmem>>, vector<1x1x16x16xf32>,
    return
  }
  func.func @transform_0(%arg0: i32, %arg1: i32) -> (i32, i32, i32, i32) {
    %c0_i32 = arith.constant 0 : i32
    %c0_i32_0 = arith.constant 0 : i32
    %c0_i32_1 = arith.constant 0 : i32
    return %arg0, %arg1, %c0_i32, %c0_i32_0 : i32, i32, i32, i32
  }
  func.func @transform_1(%arg0: i32, %arg1: i32) -> (i32, i32) {
    %c0_i32 = arith.constant 0 : i32
    %c0_i32_0 = arith.constant 0 : i32
    %c0_i32_1 = arith.constant 0 : i32
    return %c0_i32, %c0_i32_0 : i32, i32
  }
  func.func @transform_2(%arg0: i32, %arg1: i32) -> (i32, i32) {
    %c0_i32 = arith.constant 0 : i32
    %c0_i32_0 = arith.constant 0 : i32
    %c0_i32_1 = arith.constant 0 : i32
    return %c0_i32, %c0_i32_0 : i32, i32
  }
  func.func @transform_3(%arg0: i32, %arg1: i32) -> (i32, i32, i32, i32) {
    %c0_i32 = arith.constant 0 : i32
    %c0_i32_0 = arith.constant 0 : i32
    %c0_i32_1 = arith.constant 0 : i32
    return %arg0, %arg1, %c0_i32, %c0_i32_0 : i32, i32, i32, i32
  }
}

</mosaic_0001>

<llo_original>
// kernel: tpu_custom_call.1
$region0: #{tpu_custom_call.1}
  #allocation0 [shape = 'u32[]', space=smem, size = 0x4, offset = 0x4, fixed_abs, tag = 'smem constant byte address 0x4 - core index']
  #allocation1 [shape = 'u32[72,128]{1,0:T(1,128)}', space=vmem, size = 0x9000, scoped, tag = 'internal scratch']
  %s0 = inlined_call_operand.hbm [shape: f32[2,4,16,16], index: 0, kind: input, shape index: {}]
  %s1 = inlined_call_operand.hbm [shape: f32[16,16], index: 1, kind: input, shape index: {}]
  %s2 = inlined_call_operand.hbm [shape: f32[16,16], index: 2, kind: input, shape index: {}]
  %s3 = inlined_call_operand.hbm [shape: f32[2,4,16,16], index: 3, kind: output, shape index: {}]
  %s4 = sld [smem:[#allocation0]]
  $region57: #{tpu_custom_call.1} parent=0
    _
  %s6 = ssub.s32 1, %s4
  %s7 = scalar_select 0, %s6, %s4
  $region1: #{tpu_custom_call.1} parent=0
    #allocation2 [shape = 'u8[16384]{0}', space=vmem, size = 0x4000, scoped, tag = 'input window, operand 0']
    #allocation3 [shape = 's32[2]{0}', space=sflag, size = 0x8, scoped, tag = 'scoped memory for tpu_custom_call.1']
    #allocation4 [shape = 's32[2]{0}', space=sflag, size = 0x8, scoped, tag = 'scoped memory for tpu_custom_call.1']
    #allocation5 [shape = 'u8[8192]{0}', space=vmem, size = 0x2000, scoped, tag = 'input window, operand 1, single buffered']
    #allocation6 [shape = 's32[1]{0}', space=sflag, size = 0x4, scoped, tag = 'scoped memory for tpu_custom_call.1']
    #allocation7 [shape = 'u8[8192]{0}', space=vmem, size = 0x2000, scoped, tag = 'input window, operand 2, single buffered']
    #allocation8 [shape = 'u8[16384]{0}', space=vmem, size = 0x4000, scoped, tag = 'output window, operand 0']
    %8 = vsyncpa [#allocation3], 0
    %s9 = scalar_lea.sflag [#allocation3], 1
    %10 = vsyncpa %s9, 0
    %11 = vsyncpa [#allocation6], 0
    %12 = vsyncpa [#allocation4], 0
    %s13 = scalar_lea.sflag [#allocation4], 1
    %14 = vsyncpa %s13, 0
    loop: start=0, step=1, limit=10
    $region2: #{tpu_custom_call.1} parent=1 // loop_pre_header
      _
    $region3: #{tpu_custom_call.1} parent=1 // loop_header
      %s16 = sphi 0, %s20
      %p17 = scmp.ge.s32.totalorder %s16, 10
      %s23 = sphi 0, %s35
      %s24 = sphi 0, %s31
      %s25 = sphi 0, %s23
      %s26 = sphi 0, %s24
      %s27 = sphi 0, %s25
      %s28 = sphi 0, %s26
      %s40 = sphi 0, %s42
      %s43 = sphi 0, %s40
      %s44 = sphi 0, %s43
      %s60 = sphi 0, %s44
      %s64 = sphi 0, %s64
      %s66 = sphi 0, %s64
      %s67 = sphi 0, %s66
      %s81 = sphi 0, %s67
      %s85 = sphi 0, %s85
      %s87 = sphi 0, %s85
      %s88 = sphi 0, %s87
      %s102 = sphi 0, %s88
      %s110 = sphi 0, %s112
      %s113 = sphi 0, %s110
      %s114 = sphi 0, %s113
      %s130 = sphi 0, %s114
    $region4: #{tpu_custom_call.1} parent=1 // loop_header_branch
      %19 = sbr.rel (%p17) target = $region8
    $region5: #{tpu_custom_call.1} parent=1 // loop_body
      %s21 = ssub.s32 %s16, 1
      %s22 = ssub.s32 %s16, 2
      %s29 = sadd.s32 1, %s24
      %p30 = scmp.ge.s32.totalorder %s29, 4
      %s31 = scalar_select %p30, 0, %s29
      %s32 = sadd.s32 1, %s23
      %s33 = scalar_select %p30, %s32, %s23
      %p34 = scmp.ge.s32.totalorder %s33, 2
      %s35 = scalar_select %p34, 0, %s33
      %s36 = ssub.s32 %s23, %s35
      %s37 = ssub.s32 %s24, %s31
      %s38 = sor.u32 %s36, %s37
      %p39 = scmp.eq.s32.totalorder %s38, 0
      %s41 = sadd.s32 %s40, 1
      %s42 = scalar_select %p39, %s40, %s41
      %p45 = pneg %p39
      %p46 = scmp.eq.s32.totalorder %s16, 7
      %p47 = por %p45, %p46
      %p48 = scmp.ne.s32.totalorder %s40, %s43
      %p49 = scmp.eq.s32.totalorder %s16, 0
      %p50 = por %p48, %p49
      %p51 = scmp.ne.s32.totalorder %s40, %s43
      %p52 = scmp.eq.s32.totalorder %s21, 7
      %p53 = por %p51, %p52
      %p54 = scmp.ne.s32.totalorder %s43, %s44
      %p55 = scmp.eq.s32.totalorder %s21, 0
      %p56 = por %p54, %p55
      %p57 = scmp.ne.s32.totalorder %s43, %s44
      %p58 = scmp.eq.s32.totalorder %s22, 7
      %p59 = por %p57, %p58
      %p61 = scmp.ne.s32.totalorder %s44, %s60
      %p62 = scmp.eq.s32.totalorder %s22, 0
      %p63 = por %p61, %p62
      %s65 = sadd.s32 %s64, 1
      %p68 = scmp.eq.s32.totalorder %s16, 7
      %p69 = scmp.ne.s32.totalorder %s64, %s66
      %p70 = scmp.eq.s32.totalorder %s16, 0
      %p71 = por %p69, %p70
      %p72 = scmp.ne.s32.totalorder %s64, %s66
      %p73 = scmp.eq.s32.totalorder %s21, 7
      %p74 = por %p72, %p73
      %p75 = scmp.ne.s32.totalorder %s66, %s67
      %p76 = scmp.eq.s32.totalorder %s21, 0
      %p77 = por %p75, %p76
      %p78 = scmp.ne.s32.totalorder %s66, %s67
      %p79 = scmp.eq.s32.totalorder %s22, 7
      %p80 = por %p78, %p79
      %p82 = scmp.ne.s32.totalorder %s67, %s81
      %p83 = scmp.eq.s32.totalorder %s22, 0
      %p84 = por %p82, %p83
      %s86 = sadd.s32 %s85, 1
      %p89 = scmp.eq.s32.totalorder %s16, 7
      %p90 = scmp.ne.s32.totalorder %s85, %s87
      %p91 = scmp.eq.s32.totalorder %s16, 0
      %p92 = por %p90, %p91
      %p93 = scmp.ne.s32.totalorder %s85, %s87
      %p94 = scmp.eq.s32.totalorder %s21, 7
      %p95 = por %p93, %p94
      %p96 = scmp.ne.s32.totalorder %s87, %s88
      %p97 = scmp.eq.s32.totalorder %s21, 0
      %p98 = por %p96, %p97
      %p99 = scmp.ne.s32.totalorder %s87, %s88
      %p100 = scmp.eq.s32.totalorder %s22, 7
      %p101 = por %p99, %p100
      %p103 = scmp.ne.s32.totalorder %s88, %s102
      %p104 = scmp.eq.s32.totalorder %s22, 0
      %p105 = por %p103, %p104
      %s106 = ssub.s32 %s23, %s35
      %s107 = ssub.s32 %s24, %s31
      %s108 = sor.u32 %s106, %s107
      %p109 = scmp.eq.s32.totalorder %s108, 0
      %s111 = sadd.s32 %s110, 1
      %s112 = scalar_select %p109, %s110, %s111
      %p115 = pneg %p109
      %p116 = scmp.eq.s32.totalorder %s16, 7
      %p117 = por %p115, %p116
      %p118 = scmp.ne.s32.totalorder %s110, %s113
      %p119 = scmp.eq.s32.totalorder %s16, 0
      %p120 = por %p118, %p119
      %p121 = scmp.ne.s32.totalorder %s110, %s113
      %p122 = scmp.eq.s32.totalorder %s21, 7
      %p123 = por %p121, %p122
      %p124 = scmp.ne.s32.totalorder %s113, %s114
      %p125 = scmp.eq.s32.totalorder %s21, 0
      %p126 = por %p124, %p125
      %p127 = scmp.ne.s32.totalorder %s113, %s114
      %p128 = scmp.eq.s32.totalorder %s22, 7
      %p129 = por %p127, %p128
      %p131 = scmp.ne.s32.totalorder %s114, %s130
      %p132 = scmp.eq.s32.totalorder %s22, 0
      %p133 = por %p131, %p132
      %p134 = scmp.le.s32.totalorder 1, %s16
      %p135 = scmp.lt.s32.totalorder %s16, 9
      %p136 = pnand %p134, %p135
      %p137 = pneg %p136
      // Predicated region
      $region9: #{tpu_custom_call.1} parent=5 // pred_check
        _
      $region10: #{tpu_custom_call.1} parent=5 // pred_check_branch
        %139 = sbr.rel (%p136) target = $region12
      $region11: #{tpu_custom_call.1} parent=5 // pred_region
        %s140 = ssub.s32 %s16, 1
        // Predicated region
        $region13: #{tpu_custom_call.1} parent=11 // pred_check
          %p141 = pneg %p77
        $region14: #{tpu_custom_call.1} parent=11 // pred_check_branch
          %143 = sbr.rel (%p141) target = $region16
        $region15: #{tpu_custom_call.1} parent=11 // pred_region
          %145 = vsyncadd [#allocation6], 0
          %s146 = sshll.u32 %s1, 4
          %s147 = int_to_ptr.hbm [resolvable:$true] %s146
          %s148 = sshll.u32 [#allocation5], 4
          %s149 = int_to_ptr.vmem [resolvable:$true] %s148
          %154 = dma.hbm_to_vmem [thread:$0]  %s147, 256, %s149, [#allocation6], 128, 128, 8
        $region16: #{tpu_custom_call.1} parent=11 // pred_fallthru
          _
        // Predicated region
        $region17: #{tpu_custom_call.1} parent=11 // pred_check
          %p155 = pneg %p98
        $region18: #{tpu_custom_call.1} parent=11 // pred_check_branch
          %157 = sbr.rel (%p155) target = $region20
        $region19: #{tpu_custom_call.1} parent=11 // pred_region
          %159 = vsyncadd [#allocation6], 0
          %s160 = sshll.u32 %s2, 4
          %s161 = int_to_ptr.hbm [resolvable:$true] %s160
          %s162 = sshll.u32 [#allocation7], 4
          %s163 = int_to_ptr.vmem [resolvable:$true] %s162
          %168 = dma.hbm_to_vmem [thread:$0]  %s161, 256, %s163, [#allocation6], 128, 128, 8
        $region20: #{tpu_custom_call.1} parent=11 // pred_fallthru
          _
      $region12: #{tpu_custom_call.1} parent=5 // pred_fallthru
        _
      %p169 = scmp.lt.s32.totalorder %s16, 8
      // Predicated region
      $region21: #{tpu_custom_call.1} parent=5 // pred_check
        %p170 = pneg %p169
      $region22: #{tpu_custom_call.1} parent=5 // pred_check_branch
        %172 = sbr.rel (%p170) target = $region24
      $region23: #{tpu_custom_call.1} parent=5 // pred_region
        // Predicated region
        $region25: #{tpu_custom_call.1} parent=23 // pred_check
          %p173 = pneg %p50
        $region26: #{tpu_custom_call.1} parent=23 // pred_check_branch
          %175 = sbr.rel (%p173) target = $region28
        $region27: #{tpu_custom_call.1} parent=23 // pred_region
          %s176 = sand.u32 %s40, 1
          %s177 = scalar_lea.sflag [#allocation3], %s176
          %s178 = sand.u32 %s40, 1
          %s179 = smul.addr %s178, 16
          %s180 = scalar_lea.vmem [#allocation2], %s179
          %182 = vsyncadd %s177, 0
          %s183 = smul.addr %s24, 2
          %s184 = smul.addr %s23, 8
          %s185 = sadd.s32 %s183, %s184
          %s186 = smul.addr %s185, 8
          %s187 = scalar_lea.hbm %s0, %s186
          %s188 = sshll.u32 %s187, 4
          %s189 = int_to_ptr.hbm [resolvable:$true] %s188
          %s190 = sshll.u32 %s180, 4
          %s191 = int_to_ptr.vmem [resolvable:$true] %s190
          %196 = dma.hbm_to_vmem [thread:$0]  %s189, 256, %s191, %s177, 128, 128, 8
        $region28: #{tpu_custom_call.1} parent=23 // pred_fallthru
          _
      $region24: #{tpu_custom_call.1} parent=5 // pred_fallthru
        _
      %p197 = scmp.le.s32.totalorder 1, %s16
      %p198 = scmp.lt.s32.totalorder %s16, 9
      %p199 = pnand %p197, %p198
      %p200 = pneg %p199
      // Predicated region
      $region29: #{tpu_custom_call.1} parent=5 // pred_check
        _
      $region30: #{tpu_custom_call.1} parent=5 // pred_check_branch
        %202 = sbr.rel (%p199) target = $region32
      $region31: #{tpu_custom_call.1} parent=5 // pred_region
        %s203 = ssub.s32 %s16, 1
        %s204 = sand.u32 %s43, 1
        %s205 = scalar_lea.sflag [#allocation3], %s204
        %s206 = sand.u32 %s43, 1
        %s207 = smul.addr %s206, 16
        %s208 = scalar_lea.vmem [#allocation2], %s207
        // Predicated region
        $region33: #{tpu_custom_call.1} parent=31 // pred_check
          %p209 = pneg %p56
        $region34: #{tpu_custom_call.1} parent=31 // pred_check_branch
          %211 = sbr.rel (%p209) target = $region36
        $region35: #{tpu_custom_call.1} parent=31 // pred_region
          %213 = dma.done %s205, 256
        $region36: #{tpu_custom_call.1} parent=31 // pred_fallthru
          _
        // Predicated region
        $region37: #{tpu_custom_call.1} parent=31 // pred_check
          %p214 = pneg %p77
        $region38: #{tpu_custom_call.1} parent=31 // pred_check_branch
          %216 = sbr.rel (%p214) target = $region40
        $region39: #{tpu_custom_call.1} parent=31 // pred_region
          %218 = dma.done [#allocation6], 256
        $region40: #{tpu_custom_call.1} parent=31 // pred_fallthru
          _
        // Predicated region
        $region41: #{tpu_custom_call.1} parent=31 // pred_check
          %p219 = pneg %p98
        $region42: #{tpu_custom_call.1} parent=31 // pred_check_branch
          %221 = sbr.rel (%p219) target = $region44
        $region43: #{tpu_custom_call.1} parent=31 // pred_region
          %223 = dma.done [#allocation6], 256
        $region44: #{tpu_custom_call.1} parent=31 // pred_fallthru
          _
        %s224 = sand.u32 %s43, 1
        %s225 = scalar_lea.sflag [#allocation3], %s224
        %s226 = sand.u32 %s43, 1
        %s227 = smul.addr %s226, 16
        %s228 = scalar_lea.vmem [#allocation2], %s227
        %p229 = pneg %p56
        %p230 = pneg %p53
        %p231 = pneg %p77
        %p232 = pneg %p74
        %p233 = pneg %p98
        %p234 = pneg %p95
        %p235 = pneg %p126
        %p236 = pneg %p123
        %s237 = sand.u32 %s113, 1
        %s238 = scalar_lea.sflag [#allocation4], %s237
        %s239 = sand.u32 %s113, 1
        %s240 = smul.addr %s239, 16
        %s241 = scalar_lea.vmem [#allocation8], %s240
        %v242 = vld [vmem:[%s208] sm:$0xff]
        %v243 = vld [vmem:[%s208 + $0x8] sm:$0xff]
        %v244 = vld [vmem:[#allocation5] sm:$0xff]
        %v245 = vld [vmem:[#allocation5 + $0x8] sm:$0xff]
        %v246 = vld [vmem:[#allocation7] sm:$0xff]
        %v247 = vld [vmem:[#allocation7 + $0x8] sm:$0xff]
        %vm248 = vcmask 130048
        %v250 = vsel %vm248, %v244, 0
        %v253 = vsel %vm248, %v245, 0
        %255 = vmatpush.msra.mxu0 0.0
        %256 = vmatpush.msra.mxu0 0.0
        %257 = vmatpush.msra.mxu0 0.0
        %258 = vmatpush.msra.mxu0 0.0
        %259 = vmatpush.msra.mxu0 0.0
        %260 = vmatpush.msra.mxu0 0.0
        %261 = vmatpush.msra.mxu0 0.0
        %262 = vmatpush.msra.mxu0 0.0
        %263 = vmatpush.msra.mxu0 0.0
        %264 = vmatpush.msra.mxu0 0.0
        %265 = vmatpush.msra.mxu0 0.0
        %266 = vmatpush.msra.mxu0 0.0
        %267 = vmatpush.msra.mxu0 0.0
        %268 = vmatpush.msra.mxu0 0.0
        %v269 = vand.u32 %v243, 4294901760
        %270 = vmatpush.msra.mxu0 %v269
        %v271 = vand.u32 %v242, 4294901760
        %272 = vmatpush.msra.mxu0 %v271
        %v273 = vand.u32 %v250, 4294901760
        %v274 = vsub.f32 %v250, %v273
        %v275 = vand.u32 %v274, 4294901760
        %v276 = vsub.f32 %v274, %v275
        %v277 = vand.u32 %v276, 4294901760
        %278 = vmatmul.f32.gmra.mxu0 %v277
        %v279 = vpop.f32.mrf.mxu0
        %v280 = vadd.f32 0.0, %v279
        %v281 = vand.u32 %v253, 4294901760
        %v282 = vsub.f32 %v253, %v281
        %v283 = vand.u32 %v282, 4294901760
        %v284 = vsub.f32 %v282, %v283
        %v285 = vand.u32 %v284, 4294901760
        %286 = vmatmul.f32.gmra.mxu0 %v285
        %v287 = vpop.f32.mrf.mxu0
        %v288 = vadd.f32 0.0, %v287
        %289 = vdwg.mxu0
        %290 = vmatpush.msra.mxu0 0.0
        %291 = vmatpush.msra.mxu0 0.0
        %292 = vmatpush.msra.mxu0 0.0
        %293 = vmatpush.msra.mxu0 0.0
        %294 = vmatpush.msra.mxu0 0.0
        %295 = vmatpush.msra.mxu0 0.0
        %296 = vmatpush.msra.mxu0 0.0
        %297 = vmatpush.msra.mxu0 0.0
        %298 = vmatpush.msra.mxu0 0.0
        %299 = vmatpush.msra.mxu0 0.0
        %300 = vmatpush.msra.mxu0 0.0
        %301 = vmatpush.msra.mxu0 0.0
        %302 = vmatpush.msra.mxu0 0.0
        %303 = vmatpush.msra.mxu0 0.0
        %v304 = vand.u32 %v243, 4294901760
        %v305 = vsub.f32 %v243, %v304
        %v306 = vand.u32 %v305, 4294901760
        %v307 = vsub.f32 %v305, %v306
        %v308 = vand.u32 %v307, 4294901760
        %309 = vmatpush.msra.mxu0 %v308
        %v310 = vand.u32 %v242, 4294901760
        %v311 = vsub.f32 %v242, %v310
        %v312 = vand.u32 %v311, 4294901760
        %v313 = vsub.f32 %v311, %v312
        %v314 = vand.u32 %v313, 4294901760
        %315 = vmatpush.msra.mxu0 %v314
        %v316 = vand.u32 %v250, 4294901760
        %317 = vmatmul.f32.gmra.mxu0 %v316
        %v318 = vpop.f32.mrf.mxu0
        %v319 = vadd.f32 %v280, %v318
        %v320 = vand.u32 %v253, 4294901760
        %321 = vmatmul.f32.gmra.mxu0 %v320
        %v322 = vpop.f32.mrf.mxu0
        %v323 = vadd.f32 %v288, %v322
        %324 = vdwg.mxu0
        %325 = vmatpush.msra.mxu0 0.0
        %326 = vmatpush.msra.mxu0 0.0
        %327 = vmatpush.msra.mxu0 0.0
        %328 = vmatpush.msra.mxu0 0.0
        %329 = vmatpush.msra.mxu0 0.0
        %330 = vmatpush.msra.mxu0 0.0
        %331 = vmatpush.msra.mxu0 0.0
        %332 = vmatpush.msra.mxu0 0.0
        %333 = vmatpush.msra.mxu0 0.0
        %334 = vmatpush.msra.mxu0 0.0
        %335 = vmatpush.msra.mxu0 0.0
        %336 = vmatpush.msra.mxu0 0.0
        %337 = vmatpush.msra.mxu0 0.0
        %338 = vmatpush.msra.mxu0 0.0
        %v339 = vand.u32 %v243, 4294901760
        %v340 = vsub.f32 %v243, %v339
        %341 = vmatpush.msra.mxu0 %v340
        %v342 = vand.u32 %v242, 4294901760
        %v343 = vsub.f32 %v242, %v342
        %344 = vmatpush.msra.mxu0 %v343
        %v345 = vand.u32 %v250, 4294901760
        %v346 = vsub.f32 %v250, %v345
        %347 = vmatmul.f32.gmra.mxu0 %v346
        %v348 = vpop.f32.mrf.mxu0
        %v349 = vadd.f32 %v319, %v348
        %v350 = vand.u32 %v253, 4294901760
        %v351 = vsub.f32 %v253, %v350
        %352 = vmatmul.f32.gmra.mxu0 %v351
        %v353 = vpop.f32.mrf.mxu0
        %v354 = vadd.f32 %v323, %v353
        %355 = vdwg.mxu0
        %356 = vmatpush.msra.mxu0 0.0
        %357 = vmatpush.msra.mxu0 0.0
        %358 = vmatpush.msra.mxu0 0.0
        %359 = vmatpush.msra.mxu0 0.0
        %360 = vmatpush.msra.mxu0 0.0
        %361 = vmatpush.msra.mxu0 0.0
        %362 = vmatpush.msra.mxu0 0.0
        %363 = vmatpush.msra.mxu0 0.0
        %364 = vmatpush.msra.mxu0 0.0
        %365 = vmatpush.msra.mxu0 0.0
        %366 = vmatpush.msra.mxu0 0.0
        %367 = vmatpush.msra.mxu0 0.0
        %368 = vmatpush.msra.mxu0 0.0
        %369 = vmatpush.msra.mxu0 0.0
        %v370 = vand.u32 %v243, 4294901760
        %371 = vmatpush.msra.mxu0 %v370
        %v372 = vand.u32 %v242, 4294901760
        %373 = vmatpush.msra.mxu0 %v372
        %v374 = vand.u32 %v250, 4294901760
        %v375 = vsub.f32 %v250, %v374
        %v376 = vand.u32 %v375, 4294901760
        %377 = vmatmul.f32.gmra.mxu0 %v376
        %v378 = vpop.f32.mrf.mxu0
        %v379 = vadd.f32 %v349, %v378
        %v380 = vand.u32 %v253, 4294901760
        %v381 = vsub.f32 %v253, %v380
        %v382 = vand.u32 %v381, 4294901760
        %383 = vmatmul.f32.gmra.mxu0 %v382
        %v384 = vpop.f32.mrf.mxu0
        %v385 = vadd.f32 %v354, %v384
        %386 = vdwg.mxu0
        %387 = vmatpush.msra.mxu0 0.0
        %388 = vmatpush.msra.mxu0 0.0
        %389 = vmatpush.msra.mxu0 0.0
        %390 = vmatpush.msra.mxu0 0.0
        %391 = vmatpush.msra.mxu0 0.0
        %392 = vmatpush.msra.mxu0 0.0
        %393 = vmatpush.msra.mxu0 0.0
        %394 = vmatpush.msra.mxu0 0.0
        %395 = vmatpush.msra.mxu0 0.0
        %396 = vmatpush.msra.mxu0 0.0
        %397 = vmatpush.msra.mxu0 0.0
        %398 = vmatpush.msra.mxu0 0.0
        %399 = vmatpush.msra.mxu0 0.0
        %400 = vmatpush.msra.mxu0 0.0
        %v401 = vand.u32 %v243, 4294901760
        %v402 = vsub.f32 %v243, %v401
        %v403 = vand.u32 %v402, 4294901760
        %404 = vmatpush.msra.mxu0 %v403
        %v405 = vand.u32 %v242, 4294901760
        %v406 = vsub.f32 %v242, %v405
        %v407 = vand.u32 %v406, 4294901760
        %408 = vmatpush.msra.mxu0 %v407
        %v409 = vand.u32 %v250, 4294901760
        %410 = vmatmul.f32.gmra.mxu0 %v409
        %v411 = vpop.f32.mrf.mxu0
        %v412 = vadd.f32 %v379, %v411
        %v413 = vand.u32 %v253, 4294901760
        %414 = vmatmul.f32.gmra.mxu0 %v413
        %v415 = vpop.f32.mrf.mxu0
        %v416 = vadd.f32 %v385, %v415
        %417 = vdwg.mxu0
        %418 = vmatpush.msra.mxu0 0.0
        %419 = vmatpush.msra.mxu0 0.0
        %420 = vmatpush.msra.mxu0 0.0
        %421 = vmatpush.msra.mxu0 0.0
        %422 = vmatpush.msra.mxu0 0.0
        %423 = vmatpush.msra.mxu0 0.0
        %424 = vmatpush.msra.mxu0 0.0
        %425 = vmatpush.msra.mxu0 0.0
        %426 = vmatpush.msra.mxu0 0.0
        %427 = vmatpush.msra.mxu0 0.0
        %428 = vmatpush.msra.mxu0 0.0
        %429 = vmatpush.msra.mxu0 0.0
        %430 = vmatpush.msra.mxu0 0.0
        %431 = vmatpush.msra.mxu0 0.0
        %v432 = vand.u32 %v243, 4294901760
        %433 = vmatpush.msra.mxu0 %v432
        %v434 = vand.u32 %v242, 4294901760
        %435 = vmatpush.msra.mxu0 %v434
        %v436 = vand.u32 %v250, 4294901760
        %437 = vmatmul.f32.gmra.mxu0 %v436
        %v438 = vpop.f32.mrf.mxu0
        %v439 = vadd.f32 %v412, %v438
        %v440 = vand.u32 %v253, 4294901760
        %441 = vmatmul.f32.gmra.mxu0 %v440
        %v442 = vpop.f32.mrf.mxu0
        %v443 = vadd.f32 %v416, %v442
        %444 = vdwg.mxu0
        %v446 = vsel %vm248, %v439, 0
        %v449 = vsel %vm248, %v443, 0
        %451 = vmatpush.msra.mxu0 0.0
        %452 = vmatpush.msra.mxu0 0.0
        %453 = vmatpush.msra.mxu0 0.0
        %454 = vmatpush.msra.mxu0 0.0
        %455 = vmatpush.msra.mxu0 0.0
        %456 = vmatpush.msra.mxu0 0.0
        %457 = vmatpush.msra.mxu0 0.0
        %458 = vmatpush.msra.mxu0 0.0
        %459 = vmatpush.msra.mxu0 0.0
        %460 = vmatpush.msra.mxu0 0.0
        %461 = vmatpush.msra.mxu0 0.0
        %462 = vmatpush.msra.mxu0 0.0
        %463 = vmatpush.msra.mxu0 0.0
        %464 = vmatpush.msra.mxu0 0.0
        %v465 = vand.u32 %v247, 4294901760
        %466 = vmatpush.msra.mxu0 %v465
        %v467 = vand.u32 %v246, 4294901760
        %468 = vmatpush.msra.mxu0 %v467
        %v469 = vand.u32 %v446, 4294901760
        %v470 = vsub.f32 %v446, %v469
        %v471 = vand.u32 %v470, 4294901760
        %v472 = vsub.f32 %v470, %v471
        %v473 = vand.u32 %v472, 4294901760
        %474 = vmatmul.f32.gmra.mxu0 %v473
        %v475 = vpop.f32.mrf.mxu0
        %v476 = vadd.f32 0.0, %v475
        %v477 = vand.u32 %v449, 4294901760
        %v478 = vsub.f32 %v449, %v477
        %v479 = vand.u32 %v478, 4294901760
        %v480 = vsub.f32 %v478, %v479
        %v481 = vand.u32 %v480, 4294901760
        %482 = vmatmul.f32.gmra.mxu0 %v481
        %v483 = vpop.f32.mrf.mxu0
        %v484 = vadd.f32 0.0, %v483
        %485 = vdwg.mxu0
        %486 = vmatpush.msra.mxu0 0.0
        %487 = vmatpush.msra.mxu0 0.0
        %488 = vmatpush.msra.mxu0 0.0
        %489 = vmatpush.msra.mxu0 0.0
        %490 = vmatpush.msra.mxu0 0.0
        %491 = vmatpush.msra.mxu0 0.0
        %492 = vmatpush.msra.mxu0 0.0
        %493 = vmatpush.msra.mxu0 0.0
        %494 = vmatpush.msra.mxu0 0.0
        %495 = vmatpush.msra.mxu0 0.0
        %496 = vmatpush.msra.mxu0 0.0
        %497 = vmatpush.msra.mxu0 0.0
        %498 = vmatpush.msra.mxu0 0.0
        %499 = vmatpush.msra.mxu0 0.0
        %v500 = vand.u32 %v247, 4294901760
        %v501 = vsub.f32 %v247, %v500
        %v502 = vand.u32 %v501, 4294901760
        %v503 = vsub.f32 %v501, %v502
        %v504 = vand.u32 %v503, 4294901760
        %505 = vmatpush.msra.mxu0 %v504
        %v506 = vand.u32 %v246, 4294901760
        %v507 = vsub.f32 %v246, %v506
        %v508 = vand.u32 %v507, 4294901760
        %v509 = vsub.f32 %v507, %v508
        %v510 = vand.u32 %v509, 4294901760
        %511 = vmatpush.msra.mxu0 %v510
        %v512 = vand.u32 %v446, 4294901760
        %513 = vmatmul.f32.gmra.mxu0 %v512
        %v514 = vpop.f32.mrf.mxu0
        %v515 = vadd.f32 %v476, %v514
        %v516 = vand.u32 %v449, 4294901760
        %517 = vmatmul.f32.gmra.mxu0 %v516
        %v518 = vpop.f32.mrf.mxu0
        %v519 = vadd.f32 %v484, %v518
        %520 = vdwg.mxu0
        %521 = vmatpush.msra.mxu0 0.0
        %522 = vmatpush.msra.mxu0 0.0
        %523 = vmatpush.msra.mxu0 0.0
        %524 = vmatpush.msra.mxu0 0.0
        %525 = vmatpush.msra.mxu0 0.0
        %526 = vmatpush.msra.mxu0 0.0
        %527 = vmatpush.msra.mxu0 0.0
        %528 = vmatpush.msra.mxu0 0.0
        %529 = vmatpush.msra.mxu0 0.0
        %530 = vmatpush.msra.mxu0 0.0
        %531 = vmatpush.msra.mxu0 0.0
        %532 = vmatpush.msra.mxu0 0.0
        %533 = vmatpush.msra.mxu0 0.0
        %534 = vmatpush.msra.mxu0 0.0
        %v535 = vand.u32 %v247, 4294901760
        %v536 = vsub.f32 %v247, %v535
        %537 = vmatpush.msra.mxu0 %v536
        %v538 = vand.u32 %v246, 4294901760
        %v539 = vsub.f32 %v246, %v538
        %540 = vmatpush.msra.mxu0 %v539
        %v541 = vand.u32 %v446, 4294901760
        %v542 = vsub.f32 %v446, %v541
        %543 = vmatmul.f32.gmra.mxu0 %v542
        %v544 = vpop.f32.mrf.mxu0
        %v545 = vadd.f32 %v515, %v544
        %v546 = vand.u32 %v449, 4294901760
        %v547 = vsub.f32 %v449, %v546
        %548 = vmatmul.f32.gmra.mxu0 %v547
        %v549 = vpop.f32.mrf.mxu0
        %v550 = vadd.f32 %v519, %v549
        %551 = vdwg.mxu0
        %552 = vmatpush.msra.mxu0 0.0
        %553 = vmatpush.msra.mxu0 0.0
        %554 = vmatpush.msra.mxu0 0.0
        %555 = vmatpush.msra.mxu0 0.0
        %556 = vmatpush.msra.mxu0 0.0
        %557 = vmatpush.msra.mxu0 0.0
        %558 = vmatpush.msra.mxu0 0.0
        %559 = vmatpush.msra.mxu0 0.0
        %560 = vmatpush.msra.mxu0 0.0
        %561 = vmatpush.msra.mxu0 0.0
        %562 = vmatpush.msra.mxu0 0.0
        %563 = vmatpush.msra.mxu0 0.0
        %564 = vmatpush.msra.mxu0 0.0
        %565 = vmatpush.msra.mxu0 0.0
        %v566 = vand.u32 %v247, 4294901760
        %567 = vmatpush.msra.mxu0 %v566
        %v568 = vand.u32 %v246, 4294901760
        %569 = vmatpush.msra.mxu0 %v568
        %v570 = vand.u32 %v446, 4294901760
        %v571 = vsub.f32 %v446, %v570
        %v572 = vand.u32 %v571, 4294901760
        %573 = vmatmul.f32.gmra.mxu0 %v572
        %v574 = vpop.f32.mrf.mxu0
        %v575 = vadd.f32 %v545, %v574
        %v576 = vand.u32 %v449, 4294901760
        %v577 = vsub.f32 %v449, %v576
        %v578 = vand.u32 %v577, 4294901760
        %579 = vmatmul.f32.gmra.mxu0 %v578
        %v580 = vpop.f32.mrf.mxu0
        %v581 = vadd.f32 %v550, %v580
        %582 = vdwg.mxu0
        %583 = vmatpush.msra.mxu0 0.0
        %584 = vmatpush.msra.mxu0 0.0
        %585 = vmatpush.msra.mxu0 0.0
        %586 = vmatpush.msra.mxu0 0.0
        %587 = vmatpush.msra.mxu0 0.0
        %588 = vmatpush.msra.mxu0 0.0
        %589 = vmatpush.msra.mxu0 0.0
        %590 = vmatpush.msra.mxu0 0.0
        %591 = vmatpush.msra.mxu0 0.0
        %592 = vmatpush.msra.mxu0 0.0
        %593 = vmatpush.msra.mxu0 0.0
        %594 = vmatpush.msra.mxu0 0.0
        %595 = vmatpush.msra.mxu0 0.0
        %596 = vmatpush.msra.mxu0 0.0
        %v597 = vand.u32 %v247, 4294901760
        %v598 = vsub.f32 %v247, %v597
        %v599 = vand.u32 %v598, 4294901760
        %600 = vmatpush.msra.mxu0 %v599
        %v601 = vand.u32 %v246, 4294901760
        %v602 = vsub.f32 %v246, %v601
        %v603 = vand.u32 %v602, 4294901760
        %604 = vmatpush.msra.mxu0 %v603
        %v605 = vand.u32 %v446, 4294901760
        %606 = vmatmul.f32.gmra.mxu0 %v605
        %v607 = vpop.f32.mrf.mxu0
        %v608 = vadd.f32 %v575, %v607
        %v609 = vand.u32 %v449, 4294901760
        %610 = vmatmul.f32.gmra.mxu0 %v609
        %v611 = vpop.f32.mrf.mxu0
        %v612 = vadd.f32 %v581, %v611
        %613 = vdwg.mxu0
        %614 = vmatpush.msra.mxu0 0.0
        %615 = vmatpush.msra.mxu0 0.0
        %616 = vmatpush.msra.mxu0 0.0
        %617 = vmatpush.msra.mxu0 0.0
        %618 = vmatpush.msra.mxu0 0.0
        %619 = vmatpush.msra.mxu0 0.0
        %620 = vmatpush.msra.mxu0 0.0
        %621 = vmatpush.msra.mxu0 0.0
        %622 = vmatpush.msra.mxu0 0.0
        %623 = vmatpush.msra.mxu0 0.0
        %624 = vmatpush.msra.mxu0 0.0
        %625 = vmatpush.msra.mxu0 0.0
        %626 = vmatpush.msra.mxu0 0.0
        %627 = vmatpush.msra.mxu0 0.0
        %v628 = vand.u32 %v247, 4294901760
        %629 = vmatpush.msra.mxu0 %v628
        %v630 = vand.u32 %v246, 4294901760
        %631 = vmatpush.msra.mxu0 %v630
        %v632 = vand.u32 %v446, 4294901760
        %633 = vmatmul.f32.gmra.mxu0 %v632
        %v634 = vpop.f32.mrf.mxu0
        %v635 = vadd.f32 %v608, %v634
        %v636 = vand.u32 %v449, 4294901760
        %637 = vmatmul.f32.gmra.mxu0 %v636
        %v638 = vpop.f32.mrf.mxu0
        %v639 = vadd.f32 %v612, %v638
        %640 = vdwg.mxu0
        %v641 = vsub.f32 %v242, %v635
        %v642 = vsub.f32 %v243, %v639
        %v643 = vand.u32 2147483647, %v641
        %v644 = vand.u32 2147483647, %v642
        %v645 = vmul.f32 %v643, 255.0
        %v646 = vmul.f32 %v644, 255.0
        %vm647 = vcmp.gt.f32.partialorder %v645, 10.0
        %vm648 = vcmp.gt.f32.partialorder %v646, 10.0
        %v649 = vsel %vm647, 1, 0
        %v650 = vsel %vm648, 1, 0
        %v651 = vcvt.s32.f32 %v649
        %v652 = vcvt.s32.f32 %v650
        %653 = vmatpush.msra.mxu0 0.0
        %654 = vmatpush.msra.mxu0 0.0
        %655 = vmatpush.msra.mxu0 0.0
        %656 = vmatpush.msra.mxu0 0.0
        %657 = vmatpush.msra.mxu0 0.0
        %658 = vmatpush.msra.mxu0 0.0
        %659 = vmatpush.msra.mxu0 0.0
        %660 = vmatpush.msra.mxu0 0.0
        %661 = vmatpush.msra.mxu0 0.0
        %662 = vmatpush.msra.mxu0 0.0
        %663 = vmatpush.msra.mxu0 0.0
        %664 = vmatpush.msra.mxu0 0.0
        %665 = vmatpush.msra.mxu0 0.0
        %666 = vmatpush.msra.mxu0 0.0
        %v667 = vand.u32 %v652, 4294901760
        %668 = vmatpush.msra.mxu0 %v667
        %v669 = vand.u32 %v651, 4294901760
        %670 = vmatpush.msra.mxu0 %v669
        %v671 = vand.u32 %v250, 4294901760
        %v672 = vsub.f32 %v250, %v671
        %v673 = vand.u32 %v672, 4294901760
        %v674 = vsub.f32 %v672, %v673
        %v675 = vand.u32 %v674, 4294901760
        %676 = vmatmul.f32.gmra.mxu0 %v675
        %v677 = vpop.f32.mrf.mxu0
        %v678 = vadd.f32 0.0, %v677
        %v679 = vand.u32 %v253, 4294901760
        %v680 = vsub.f32 %v253, %v679
        %v681 = vand.u32 %v680, 4294901760
        %v682 = vsub.f32 %v680, %v681
        %v683 = vand.u32 %v682, 4294901760
        %684 = vmatmul.f32.gmra.mxu0 %v683
        %v685 = vpop.f32.mrf.mxu0
        %v686 = vadd.f32 0.0, %v685
        %687 = vdwg.mxu0
        %688 = vmatpush.msra.mxu0 0.0
        %689 = vmatpush.msra.mxu0 0.0
        %690 = vmatpush.msra.mxu0 0.0
        %691 = vmatpush.msra.mxu0 0.0
        %692 = vmatpush.msra.mxu0 0.0
        %693 = vmatpush.msra.mxu0 0.0
        %694 = vmatpush.msra.mxu0 0.0
        %695 = vmatpush.msra.mxu0 0.0
        %696 = vmatpush.msra.mxu0 0.0
        %697 = vmatpush.msra.mxu0 0.0
        %698 = vmatpush.msra.mxu0 0.0
        %699 = vmatpush.msra.mxu0 0.0
        %700 = vmatpush.msra.mxu0 0.0
        %701 = vmatpush.msra.mxu0 0.0
        %v702 = vand.u32 %v652, 4294901760
        %v703 = vsub.f32 %v652, %v702
        %v704 = vand.u32 %v703, 4294901760
        %v705 = vsub.f32 %v703, %v704
        %v706 = vand.u32 %v705, 4294901760
        %707 = vmatpush.msra.mxu0 %v706
        %v708 = vand.u32 %v651, 4294901760
        %v709 = vsub.f32 %v651, %v708
        %v710 = vand.u32 %v709, 4294901760
        %v711 = vsub.f32 %v709, %v710
        %v712 = vand.u32 %v711, 4294901760
        %713 = vmatpush.msra.mxu0 %v712
        %v714 = vand.u32 %v250, 4294901760
        %715 = vmatmul.f32.gmra.mxu0 %v714
        %v716 = vpop.f32.mrf.mxu0
        %v717 = vadd.f32 %v678, %v716
        %v718 = vand.u32 %v253, 4294901760
        %719 = vmatmul.f32.gmra.mxu0 %v718
        %v720 = vpop.f32.mrf.mxu0
        %v721 = vadd.f32 %v686, %v720
        %722 = vdwg.mxu0
        %723 = vmatpush.msra.mxu0 0.0
        %724 = vmatpush.msra.mxu0 0.0
        %725 = vmatpush.msra.mxu0 0.0
        %726 = vmatpush.msra.mxu0 0.0
        %727 = vmatpush.msra.mxu0 0.0
        %728 = vmatpush.msra.mxu0 0.0
        %729 = vmatpush.msra.mxu0 0.0
        %730 = vmatpush.msra.mxu0 0.0
        %731 = vmatpush.msra.mxu0 0.0
        %732 = vmatpush.msra.mxu0 0.0
        %733 = vmatpush.msra.mxu0 0.0
        %734 = vmatpush.msra.mxu0 0.0
        %735 = vmatpush.msra.mxu0 0.0
        %736 = vmatpush.msra.mxu0 0.0
        %v737 = vand.u32 %v652, 4294901760
        %v738 = vsub.f32 %v652, %v737
        %739 = vmatpush.msra.mxu0 %v738
        %v740 = vand.u32 %v651, 4294901760
        %v741 = vsub.f32 %v651, %v740
        %742 = vmatpush.msra.mxu0 %v741
        %v743 = vand.u32 %v250, 4294901760
        %v744 = vsub.f32 %v250, %v743
        %745 = vmatmul.f32.gmra.mxu0 %v744
        %v746 = vpop.f32.mrf.mxu0
        %v747 = vadd.f32 %v717, %v746
        %v748 = vand.u32 %v253, 4294901760
        %v749 = vsub.f32 %v253, %v748
        %750 = vmatmul.f32.gmra.mxu0 %v749
        %v751 = vpop.f32.mrf.mxu0
        %v752 = vadd.f32 %v721, %v751
        %753 = vdwg.mxu0
        %754 = vmatpush.msra.mxu0 0.0
        %755 = vmatpush.msra.mxu0 0.0
        %756 = vmatpush.msra.mxu0 0.0
        %757 = vmatpush.msra.mxu0 0.0
        %758 = vmatpush.msra.mxu0 0.0
        %759 = vmatpush.msra.mxu0 0.0
        %760 = vmatpush.msra.mxu0 0.0
        %761 = vmatpush.msra.mxu0 0.0
        %762 = vmatpush.msra.mxu0 0.0
        %763 = vmatpush.msra.mxu0 0.0
        %764 = vmatpush.msra.mxu0 0.0
        %765 = vmatpush.msra.mxu0 0.0
        %766 = vmatpush.msra.mxu0 0.0
        %767 = vmatpush.msra.mxu0 0.0
        %v768 = vand.u32 %v652, 4294901760
        %769 = vmatpush.msra.mxu0 %v768
        %v770 = vand.u32 %v651, 4294901760
        %771 = vmatpush.msra.mxu0 %v770
        %v772 = vand.u32 %v250, 4294901760
        %v773 = vsub.f32 %v250, %v772
        %v774 = vand.u32 %v773, 4294901760
        %775 = vmatmul.f32.gmra.mxu0 %v774
        %v776 = vpop.f32.mrf.mxu0
        %v777 = vadd.f32 %v747, %v776
        %v778 = vand.u32 %v253, 4294901760
        %v779 = vsub.f32 %v253, %v778
        %v780 = vand.u32 %v779, 4294901760
        %781 = vmatmul.f32.gmra.mxu0 %v780
        %v782 = vpop.f32.mrf.mxu0
        %v783 = vadd.f32 %v752, %v782
        %784 = vdwg.mxu0
        %785 = vmatpush.msra.mxu0 0.0
        %786 = vmatpush.msra.mxu0 0.0
        %787 = vmatpush.msra.mxu0 0.0
        %788 = vmatpush.msra.mxu0 0.0
        %789 = vmatpush.msra.mxu0 0.0
        %790 = vmatpush.msra.mxu0 0.0
        %791 = vmatpush.msra.mxu0 0.0
        %792 = vmatpush.msra.mxu0 0.0
        %793 = vmatpush.msra.mxu0 0.0
        %794 = vmatpush.msra.mxu0 0.0
        %795 = vmatpush.msra.mxu0 0.0
        %796 = vmatpush.msra.mxu0 0.0
        %797 = vmatpush.msra.mxu0 0.0
        %798 = vmatpush.msra.mxu0 0.0
        %v799 = vand.u32 %v652, 4294901760
        %v800 = vsub.f32 %v652, %v799
        %v801 = vand.u32 %v800, 4294901760
        %802 = vmatpush.msra.mxu0 %v801
        %v803 = vand.u32 %v651, 4294901760
        %v804 = vsub.f32 %v651, %v803
        %v805 = vand.u32 %v804, 4294901760
        %806 = vmatpush.msra.mxu0 %v805
        %v807 = vand.u32 %v250, 4294901760
        %808 = vmatmul.f32.gmra.mxu0 %v807
        %v809 = vpop.f32.mrf.mxu0
        %v810 = vadd.f32 %v777, %v809
        %v811 = vand.u32 %v253, 4294901760
        %812 = vmatmul.f32.gmra.mxu0 %v811
        %v813 = vpop.f32.mrf.mxu0
        %v814 = vadd.f32 %v783, %v813
        %815 = vdwg.mxu0
        %816 = vmatpush.msra.mxu0 0.0
        %817 = vmatpush.msra.mxu0 0.0
        %818 = vmatpush.msra.mxu0 0.0
        %819 = vmatpush.msra.mxu0 0.0
        %820 = vmatpush.msra.mxu0 0.0
        %821 = vmatpush.msra.mxu0 0.0
        %822 = vmatpush.msra.mxu0 0.0
        %823 = vmatpush.msra.mxu0 0.0
        %824 = vmatpush.msra.mxu0 0.0
        %825 = vmatpush.msra.mxu0 0.0
        %826 = vmatpush.msra.mxu0 0.0
        %827 = vmatpush.msra.mxu0 0.0
        %828 = vmatpush.msra.mxu0 0.0
        %829 = vmatpush.msra.mxu0 0.0
        %v830 = vand.u32 %v652, 4294901760
        %831 = vmatpush.msra.mxu0 %v830
        %v832 = vand.u32 %v651, 4294901760
        %833 = vmatpush.msra.mxu0 %v832
        %v834 = vand.u32 %v250, 4294901760
        %835 = vmatmul.f32.gmra.mxu0 %v834
        %v836 = vpop.f32.mrf.mxu0
        %v837 = vadd.f32 %v810, %v836
        %v838 = vand.u32 %v253, 4294901760
        %839 = vmatmul.f32.gmra.mxu0 %v838
        %v840 = vpop.f32.mrf.mxu0
        %v841 = vadd.f32 %v814, %v840
        %842 = vdwg.mxu0
        %v844 = vsel %vm248, %v837, 0
        %v847 = vsel %vm248, %v841, 0
        %849 = vmatpush.msra.mxu0 0.0
        %850 = vmatpush.msra.mxu0 0.0
        %851 = vmatpush.msra.mxu0 0.0
        %852 = vmatpush.msra.mxu0 0.0
        %853 = vmatpush.msra.mxu0 0.0
        %854 = vmatpush.msra.mxu0 0.0
        %855 = vmatpush.msra.mxu0 0.0
        %856 = vmatpush.msra.mxu0 0.0
        %857 = vmatpush.msra.mxu0 0.0
        %858 = vmatpush.msra.mxu0 0.0
        %859 = vmatpush.msra.mxu0 0.0
        %860 = vmatpush.msra.mxu0 0.0
        %861 = vmatpush.msra.mxu0 0.0
        %862 = vmatpush.msra.mxu0 0.0
        %v863 = vand.u32 %v247, 4294901760
        %864 = vmatpush.msra.mxu0 %v863
        %v865 = vand.u32 %v246, 4294901760
        %866 = vmatpush.msra.mxu0 %v865
        %v867 = vand.u32 %v844, 4294901760
        %v868 = vsub.f32 %v844, %v867
        %v869 = vand.u32 %v868, 4294901760
        %v870 = vsub.f32 %v868, %v869
        %v871 = vand.u32 %v870, 4294901760
        %872 = vmatmul.f32.gmra.mxu0 %v871
        %v873 = vpop.f32.mrf.mxu0
        %v874 = vadd.f32 0.0, %v873
        %v875 = vand.u32 %v847, 4294901760
        %v876 = vsub.f32 %v847, %v875
        %v877 = vand.u32 %v876, 4294901760
        %v878 = vsub.f32 %v876, %v877
        %v879 = vand.u32 %v878, 4294901760
        %880 = vmatmul.f32.gmra.mxu0 %v879
        %v881 = vpop.f32.mrf.mxu0
        %v882 = vadd.f32 0.0, %v881
        %883 = vdwg.mxu0
        %884 = vmatpush.msra.mxu0 0.0
        %885 = vmatpush.msra.mxu0 0.0
        %886 = vmatpush.msra.mxu0 0.0
        %887 = vmatpush.msra.mxu0 0.0
        %888 = vmatpush.msra.mxu0 0.0
        %889 = vmatpush.msra.mxu0 0.0
        %890 = vmatpush.msra.mxu0 0.0
        %891 = vmatpush.msra.mxu0 0.0
        %892 = vmatpush.msra.mxu0 0.0
        %893 = vmatpush.msra.mxu0 0.0
        %894 = vmatpush.msra.mxu0 0.0
        %895 = vmatpush.msra.mxu0 0.0
        %896 = vmatpush.msra.mxu0 0.0
        %897 = vmatpush.msra.mxu0 0.0
        %v898 = vand.u32 %v247, 4294901760
        %v899 = vsub.f32 %v247, %v898
        %v900 = vand.u32 %v899, 4294901760
        %v901 = vsub.f32 %v899, %v900
        %v902 = vand.u32 %v901, 4294901760
        %903 = vmatpush.msra.mxu0 %v902
        %v904 = vand.u32 %v246, 4294901760
        %v905 = vsub.f32 %v246, %v904
        %v906 = vand.u32 %v905, 4294901760
        %v907 = vsub.f32 %v905, %v906
        %v908 = vand.u32 %v907, 4294901760
        %909 = vmatpush.msra.mxu0 %v908
        %v910 = vand.u32 %v844, 4294901760
        %911 = vmatmul.f32.gmra.mxu0 %v910
        %v912 = vpop.f32.mrf.mxu0
        %v913 = vadd.f32 %v874, %v912
        %v914 = vand.u32 %v847, 4294901760
        %915 = vmatmul.f32.gmra.mxu0 %v914
        %v916 = vpop.f32.mrf.mxu0
        %v917 = vadd.f32 %v882, %v916
        %918 = vdwg.mxu0
        %919 = vmatpush.msra.mxu0 0.0
        %920 = vmatpush.msra.mxu0 0.0
        %921 = vmatpush.msra.mxu0 0.0
        %922 = vmatpush.msra.mxu0 0.0
        %923 = vmatpush.msra.mxu0 0.0
        %924 = vmatpush.msra.mxu0 0.0
        %925 = vmatpush.msra.mxu0 0.0
        %926 = vmatpush.msra.mxu0 0.0
        %927 = vmatpush.msra.mxu0 0.0
        %928 = vmatpush.msra.mxu0 0.0
        %929 = vmatpush.msra.mxu0 0.0
        %930 = vmatpush.msra.mxu0 0.0
        %931 = vmatpush.msra.mxu0 0.0
        %932 = vmatpush.msra.mxu0 0.0
        %v933 = vand.u32 %v247, 4294901760
        %v934 = vsub.f32 %v247, %v933
        %935 = vmatpush.msra.mxu0 %v934
        %v936 = vand.u32 %v246, 4294901760
        %v937 = vsub.f32 %v246, %v936
        %938 = vmatpush.msra.mxu0 %v937
        %v939 = vand.u32 %v844, 4294901760
        %v940 = vsub.f32 %v844, %v939
        %941 = vmatmul.f32.gmra.mxu0 %v940
        %v942 = vpop.f32.mrf.mxu0
        %v943 = vadd.f32 %v913, %v942
        %v944 = vand.u32 %v847, 4294901760
        %v945 = vsub.f32 %v847, %v944
        %946 = vmatmul.f32.gmra.mxu0 %v945
        %v947 = vpop.f32.mrf.mxu0
        %v948 = vadd.f32 %v917, %v947
        %949 = vdwg.mxu0
        %950 = vmatpush.msra.mxu0 0.0
        %951 = vmatpush.msra.mxu0 0.0
        %952 = vmatpush.msra.mxu0 0.0
        %953 = vmatpush.msra.mxu0 0.0
        %954 = vmatpush.msra.mxu0 0.0
        %955 = vmatpush.msra.mxu0 0.0
        %956 = vmatpush.msra.mxu0 0.0
        %957 = vmatpush.msra.mxu0 0.0
        %958 = vmatpush.msra.mxu0 0.0
        %959 = vmatpush.msra.mxu0 0.0
        %960 = vmatpush.msra.mxu0 0.0
        %961 = vmatpush.msra.mxu0 0.0
        %962 = vmatpush.msra.mxu0 0.0
        %963 = vmatpush.msra.mxu0 0.0
        %v964 = vand.u32 %v247, 4294901760
        %965 = vmatpush.msra.mxu0 %v964
        %v966 = vand.u32 %v246, 4294901760
        %967 = vmatpush.msra.mxu0 %v966
        %v968 = vand.u32 %v844, 4294901760
        %v969 = vsub.f32 %v844, %v968
        %v970 = vand.u32 %v969, 4294901760
        %971 = vmatmul.f32.gmra.mxu0 %v970
        %v972 = vpop.f32.mrf.mxu0
        %v973 = vadd.f32 %v943, %v972
        %v974 = vand.u32 %v847, 4294901760
        %v975 = vsub.f32 %v847, %v974
        %v976 = vand.u32 %v975, 4294901760
        %977 = vmatmul.f32.gmra.mxu0 %v976
        %v978 = vpop.f32.mrf.mxu0
        %v979 = vadd.f32 %v948, %v978
        %980 = vdwg.mxu0
        %981 = vmatpush.msra.mxu0 0.0
        %982 = vmatpush.msra.mxu0 0.0
        %983 = vmatpush.msra.mxu0 0.0
        %984 = vmatpush.msra.mxu0 0.0
        %985 = vmatpush.msra.mxu0 0.0
        %986 = vmatpush.msra.mxu0 0.0
        %987 = vmatpush.msra.mxu0 0.0
        %988 = vmatpush.msra.mxu0 0.0
        %989 = vmatpush.msra.mxu0 0.0
        %990 = vmatpush.msra.mxu0 0.0
        %991 = vmatpush.msra.mxu0 0.0
        %992 = vmatpush.msra.mxu0 0.0
        %993 = vmatpush.msra.mxu0 0.0
        %994 = vmatpush.msra.mxu0 0.0
        %v995 = vand.u32 %v247, 4294901760
        %v996 = vsub.f32 %v247, %v995
        %v997 = vand.u32 %v996, 4294901760
        %998 = vmatpush.msra.mxu0 %v997
        %v999 = vand.u32 %v246, 4294901760
        %v1000 = vsub.f32 %v246, %v999
        %v1001 = vand.u32 %v1000, 4294901760
        %1002 = vmatpush.msra.mxu0 %v1001
        %v1003 = vand.u32 %v844, 4294901760
        %1004 = vmatmul.f32.gmra.mxu0 %v1003
        %v1005 = vpop.f32.mrf.mxu0
        %v1006 = vadd.f32 %v973, %v1005
        %v1007 = vand.u32 %v847, 4294901760
        %1008 = vmatmul.f32.gmra.mxu0 %v1007
        %v1009 = vpop.f32.mrf.mxu0
        %v1010 = vadd.f32 %v979, %v1009
        %1011 = vdwg.mxu0
        %1012 = vmatpush.msra.mxu0 0.0
        %1013 = vmatpush.msra.mxu0 0.0
        %1014 = vmatpush.msra.mxu0 0.0
        %1015 = vmatpush.msra.mxu0 0.0
        %1016 = vmatpush.msra.mxu0 0.0
        %1017 = vmatpush.msra.mxu0 0.0
        %1018 = vmatpush.msra.mxu0 0.0
        %1019 = vmatpush.msra.mxu0 0.0
        %1020 = vmatpush.msra.mxu0 0.0
        %1021 = vmatpush.msra.mxu0 0.0
        %1022 = vmatpush.msra.mxu0 0.0
        %1023 = vmatpush.msra.mxu0 0.0
        %1024 = vmatpush.msra.mxu0 0.0
        %1025 = vmatpush.msra.mxu0 0.0
        %v1026 = vand.u32 %v247, 4294901760
        %1027 = vmatpush.msra.mxu0 %v1026
        %v1028 = vand.u32 %v246, 4294901760
        %1029 = vmatpush.msra.mxu0 %v1028
        %v1030 = vand.u32 %v844, 4294901760
        %1031 = vmatmul.f32.gmra.mxu0 %v1030
        %v1032 = vpop.f32.mrf.mxu0
        %v1033 = vadd.f32 %v1006, %v1032
        %v1034 = vand.u32 %v847, 4294901760
        %1035 = vmatmul.f32.gmra.mxu0 %v1034
        %v1036 = vpop.f32.mrf.mxu0
        %v1037 = vadd.f32 %v1010, %v1036
        %1038 = vdwg.mxu0
        %v1039 = vmul.f32 %v641, 0.5
        %v1040 = vmul.f32 %v642, 0.5
        %v1041 = vadd.f32 %v242, %v1039
        %v1042 = vadd.f32 %v243, %v1040
        %v1043 = vmax.f32 %v1041, 0.0
        %v1044 = vmax.f32 %v1042, 0.0
        %v1045 = vmin.f32 %v1043, 1.0
        %v1046 = vmin.f32 %v1044, 1.0
        %v1047 = vmul.f32 %v1033, %v1045
        %v1048 = vmul.f32 %v1037, %v1046
        %v1049 = vsub.f32 1.0, %v1033
        %v1050 = vsub.f32 1.0, %v1037
        %v1051 = vmul.f32 %v1049, %v242
        %v1052 = vmul.f32 %v1050, %v243
        %v1053 = vadd.f32 %v1047, %v1051
        %v1054 = vadd.f32 %v1048, %v1052
        %1055 = vst.msk [vmem:[%s241] sm:$0xff] %vm248, %v1053
        %1056 = vst.msk [vmem:[%s241 + $0x8] sm:$0xff] %vm248, %v1054
        %s1057 = sand.u32 %s113, 1
        %s1058 = scalar_lea.sflag [#allocation4], %s1057
        %s1059 = sand.u32 %s113, 1
        %s1060 = smul.addr %s1059, 16
        %s1061 = scalar_lea.vmem [#allocation8], %s1060
        // Predicated region
        $region45: #{tpu_custom_call.1} parent=31 // pred_check
          %p1062 = pneg %p123
        $region46: #{tpu_custom_call.1} parent=31 // pred_check_branch
          %1064 = sbr.rel (%p1062) target = $region48
        $region47: #{tpu_custom_call.1} parent=31 // pred_region
          %1066 = vsyncadd %s1058, 0
          %s1067 = smul.addr %s26, 2
          %s1068 = smul.addr %s25, 8
          %s1069 = sadd.s32 %s1067, %s1068
          %s1070 = smul.addr %s1069, 8
          %s1071 = scalar_lea.hbm %s3, %s1070
          %s1072 = sshll.u32 %s1061, 4
          %s1073 = int_to_ptr.vmem [resolvable:$true] %s1072
          %s1074 = sshll.u32 %s1071, 4
          %s1075 = int_to_ptr.hbm [resolvable:$true] %s1074
          %1080 = dma.vmem_to_hbm [thread:$0]  %s1073, 256, %s1075, %s1058, 128, 128, 8
        $region48: #{tpu_custom_call.1} parent=31 // pred_fallthru
          _
      $region32: #{tpu_custom_call.1} parent=5 // pred_fallthru
        _
      %p1081 = scmp.le.s32.totalorder 2, %s16
      // Predicated region
      $region49: #{tpu_custom_call.1} parent=5 // pred_check
        %p1082 = pneg %p1081
      $region50: #{tpu_custom_call.1} parent=5 // pred_check_branch
        %1084 = sbr.rel (%p1082) target = $region52
      $region51: #{tpu_custom_call.1} parent=5 // pred_region
        %s1085 = ssub.s32 %s16, 2
        // Predicated region
        $region53: #{tpu_custom_call.1} parent=51 // pred_check
          %p1086 = pneg %p129
        $region54: #{tpu_custom_call.1} parent=51 // pred_check_branch
          %1088 = sbr.rel (%p1086) target = $region56
        $region55: #{tpu_custom_call.1} parent=51 // pred_region
          %s1089 = sand.u32 %s114, 1
          %s1090 = scalar_lea.sflag [#allocation4], %s1089
          %s1091 = sand.u32 %s114, 1
          %s1092 = smul.addr %s1091, 16
          %s1093 = scalar_lea.vmem [#allocation8], %s1092
          %1095 = dma.done %s1090, 256
        $region56: #{tpu_custom_call.1} parent=51 // pred_fallthru
          _
      $region52: #{tpu_custom_call.1} parent=5 // pred_fallthru
        _
    $region6: #{tpu_custom_call.1} parent=1 // loop_footer
      %s20 = sadd.s32 1, %s16
    $region7: #{tpu_custom_call.1} parent=1 // loop_footer_branch
      %15 = sbr.rel target = $region3
    $region8: #{tpu_custom_call.1} parent=1 // loop_exit
      _
    %1096 = vsyncpa [#allocation3], 1
    %s1097 = scalar_lea.sflag [#allocation3], 1
    %1098 = vsyncpa %s1097, 1
    %1099 = vsyncpa [#allocation6], 1
    %1100 = vsyncpa [#allocation4], 1
    %s1101 = scalar_lea.sflag [#allocation4], 1
    %1102 = vsyncpa %s1101, 1

</llo_original>
